<compile_context>
chip_gen: v5e
topology: v5e:2x2
jax: 0.10.0
libtpu: 0.0.40
codegen_flags: <defaults>
</compile_context>

<pallas_src>
import numpy as np
import jax
import jax.numpy as jnp
from jax import lax
from jax.experimental import pallas as pl
from jax.experimental.pallas import tpu as pltpu


def _round_up(x, m):
    return ((x + m - 1) // m) * m


def _pick_tile_s(S, cap=512):
    """Largest multiple of 8 that divides S and is <= cap (falls back to S)."""
    best = None
    t = 8
    while t <= min(S, cap):
        if S % t == 0:
            best = t
        t += 8
    return best if best is not None else S


def _posemb_gemm_kernel(p_ref, w_ref, b_ref, o_ref):
    # p_ref: (1, tileS, Kpad)   im2col patches (lane-dense, K padded to 128-mult)
    # w_ref: (Kpad, Coutp)      conv weight as a single GEMM operand
    # b_ref: (1, Coutp)         conv bias (zero-padded)
    # o_ref: (1, tileS, Coutp)  lane-dense output block
    acc = jnp.dot(p_ref[0], w_ref[...], preferred_element_type=jnp.float32)
    o_ref[0] = (acc + b_ref[...]).astype(o_ref.dtype)


def positional_embedding_forward(x_ncdhw, weight_torch, bias):
    """x_ncdhw: (B, Cin, D, H, W) float32  (PyTorch NCDHW convention)
       weight_torch: (Cout, Cin, 3, 3, 3)
       bias: (Cout,)
       returns: (B, D*H*W, Cout)  == torch forward's x.transpose(1, 2)
       (The module's position embedding is nn.Parameter(zeros) built inside
        forward, so it contributes nothing and is not DMA'd.)
    """
    B, Cin, D, H, W = x_ncdhw.shape
    Cout = weight_torch.shape[0]
    S = D * H * W
    K = 27 * Cin
    Kpad = _round_up(max(K, 128), 128)
    Coutp = _round_up(max(Cout, 128), 128)
    tileS = _pick_tile_s(S)

    # ---- Glue (XLA): NCDHW -> NDHWC, pad, im2col gather, K/Cout padding. ----
    x_ndhwc = jnp.transpose(x_ncdhw, (0, 2, 3, 4, 1))                # (B, D, H, W, Cin)
    xp = jnp.pad(x_ndhwc, ((0, 0), (1, 1), (1, 1), (1, 1), (0, 0)))  # (B, Dp, Hp, Wp, Cin)

    slabs = []
    for kd in range(3):
        for kh in range(3):
            for kw in range(3):
                slabs.append(xp[:, kd:kd + D, kh:kh + H, kw:kw + W, :])  # (B,D,H,W,Cin)
    # (B, D, H, W, 27, Cin) -> (B, S, 27*Cin); rows are (d,h,w)-major, K is
    # (kd,kh,kw)-major with cin fastest -> matches the weight reshape below.
    patches = jnp.stack(slabs, axis=4).reshape(B, S, K)
    patches = jnp.pad(patches, ((0, 0), (0, 0), (0, Kpad - K)))          # (B, S, Kpad)

    # weight (Cout, Cin, kd, kh, kw) -> (kd, kh, kw, Cin, Cout) -> (K, Cout) -> padded
    w_km = jnp.transpose(weight_torch, (2, 3, 4, 1, 0)).reshape(K, Cout)
    w_km = jnp.pad(w_km, ((0, Kpad - K), (0, Coutp - Cout)))             # (Kpad, Coutp)
    b_pad = jnp.pad(bias, (0, Coutp - Cout)).reshape(1, Coutp)           # (1, Coutp)

    # ---- Pallas: one lane-dense GEMM per (batch, spatial-tile) grid step. ----
    out_padded = pl.pallas_call(
        _posemb_gemm_kernel,
        out_shape=jax.ShapeDtypeStruct((B, S, Coutp), jnp.float32),
        grid=(B, S // tileS),
        in_specs=[
            pl.BlockSpec((1, tileS, Kpad), lambda b, s: (b, s, 0)),
            pl.BlockSpec((Kpad, Coutp), lambda b, s: (0, 0)),
            pl.BlockSpec((1, Coutp), lambda b, s: (0, 0)),
        ],
        out_specs=pl.BlockSpec((1, tileS, Coutp), lambda b, s: (b, s, 0)),
        compiler_params=pltpu.CompilerParams(
            dimension_semantics=("parallel", "parallel")),
    )(patches, w_km, b_pad)

    return out_padded[:, :, :Cout]                                       # (B, S, Cout)


def _reference_forward(x_ncdhw, weight_torch, bias, pos_emb_bsc):
    """Pure-JAX reference replicating the PyTorch forward."""
    B, Cin, D, H, W = x_ncdhw.shape
    Cout = weight_torch.shape[0]
    x_ndhwc = jnp.transpose(x_ncdhw, (0, 2, 3, 4, 1))
    w_dhwio = jnp.transpose(weight_torch, (2, 3, 4, 1, 0))  # (3,3,3,Cin,Cout)
    y = lax.conv_general_dilated(
        x_ndhwc, w_dhwio, window_strides=(1, 1, 1),
        padding=((1, 1), (1, 1), (1, 1)),
        dimension_numbers=("NDHWC", "DHWIO", "NDHWC"))
    y = y + bias[None, None, None, None, :]
    y = y.reshape(B, D * H * W, Cout)          # == reshape(B,Cout,DHW).transpose(1,2)
    return y + pos_emb_bsc


if __name__ == "__main__":
    # Small shapes consistent with the module: NCDHW input.
    B, Cin, Cout = 2, 4, 8
    D, H, W = 4, 8, 8
    S = D * H * W

    key = jax.random.PRNGKey(0)
    kx, kw, kb = jax.random.split(key, 3)

    x = jax.random.normal(kx, (B, Cin, D, H, W), dtype=jnp.float32)
    fan_in = Cin * 27
    weight = jax.random.normal(kw, (Cout, Cin, 3, 3, 3), dtype=jnp.float32) / np.sqrt(fan_in)
    bias = jax.random.normal(kb, (Cout,), dtype=jnp.float32) * 0.1
    # The module constructs nn.Parameter(torch.zeros(...)) inside forward -> zeros.
    pos_emb = jnp.zeros((B, S, Cout), dtype=jnp.float32)

    out = positional_embedding_forward(x, weight, bias)
    out = jax.block_until_ready(out)

    ref = _reference_forward(x, weight, bias, pos_emb)
    np.testing.assert_allclose(np.asarray(out), np.asarray(ref), rtol=1e-5, atol=1e-5)
    assert out.shape == (B, S, Cout)

    print("KERNEL_OK")
</pallas_src>

<mosaic_0001>
module attributes {stable_mosaic.version = 11 : i64} {
  func.func @_posemb_gemm_kernel(%arg0: i32, %arg1: i32, %arg2: memref<1x256x128xf32, #tpu.memory_space<vmem>>, %arg3: memref<128x128xf32, #tpu.memory_space<vmem>>, %arg4: memref<1x128xf32, #tpu.memory_space<vmem>>, %arg5: memref<1x256x128xf32, #tpu.memory_space<vmem>>) attributes {dimension_semantics = [#tpu.dimension_semantics<parallel>, #tpu.dimension_semantics<parallel>], iteration_bounds = array<i64: 2, 1>, scalar_prefetch = 0 : i64, scratch_operands = 0 : i64, tpu.core_type = #tpu.core_type<tc>, window_params = [{transform_indices = @transform_0, window_bounds = array<i64: 1, 256, 128>}, {pipeline_mode = #tpu.pipeline_mode<synchronous>, transform_indices = @transform_1, window_bounds = array<i64: 128, 128>}, {pipeline_mode = #tpu.pipeline_mode<synchronous>, transform_indices = @transform_2, window_bounds = array<i64: 1, 128>}, {transform_indices = @transform_3, window_bounds = array<i64: 1, 256, 128>}]} {
    %c0 = arith.constant 0 : index
    %c0_0 = arith.constant 0 : index
    %c0_1 = arith.constant 0 : index
    %0 = vector.load %arg2[%c0, %c0_0, %c0_1] : memref<1x256x128xf32, #tpu.memory_space<vmem>>, vector<1x256x128xf32>
    %1 = vector.shape_cast %0 : vector<1x256x128xf32> to vector<256x128xf32>
    %c0_2 = arith.constant 0 : index
    %c0_3 = arith.constant 0 : index
    %2 = vector.load %arg3[%c0_2, %c0_3] : memref<128x128xf32, #tpu.memory_space<vmem>>, vector<128x128xf32>
    %cst = arith.constant dense<0.000000e+00> : vector<256x128xf32>
    %3 = tpu.matmul %1, %2, %cst {dimension_numbers = #tpu.dot_dimension_numbers<[1], [0], [0], [1], [0, 0, 1, 1], [], []>} : vector<256x128xf32>, vector<128x128xf32>, vector<256x128xf32> -> vector<256x128xf32>
    %c0_4 = arith.constant 0 : index
    %c0_5 = arith.constant 0 : index
    %4 = vector.load %arg4[%c0_4, %c0_5] : memref<1x128xf32, #tpu.memory_space<vmem>>, vector<1x128xf32>
    %5 = vector.broadcast %4 : vector<1x128xf32> to vector<256x128xf32>
    %6 = arith.addf %3, %5 : vector<256x128xf32>
    %c0_6 = arith.constant 0 : index
    %c0_7 = arith.constant 0 : index
    %c0_8 = arith.constant 0 : index
    %7 = vector.load %arg5[%c0_6, %c0_7, %c0_8] : memref<1x256x128xf32, #tpu.memory_space<vmem>>, vector<1x256x128xf32>
    %8 = vector.shape_cast %7 : vector<1x256x128xf32> to vector<256x128xf32>
    %9 = vector.shape_cast %6 : vector<256x128xf32> to vector<1x256x128xf32>
    tpu.vector_store %arg5[%c0_6, %c0_7, %c0_8], %9 {strides = array<i32>} : memref<1x256x128xf32, #tpu.memory_space<vmem>>, vector<1x256x128xf32>,
    return
  }
  func.func @transform_0(%arg0: i32, %arg1: i32) -> (i32, i32, i32) {
    %c0_i32 = arith.constant 0 : i32
    %c0_i32_0 = arith.constant 0 : i32
    return %arg0, %arg1, %c0_i32 : i32, i32, i32
  }
  func.func @transform_1(%arg0: i32, %arg1: i32) -> (i32, i32) {
    %c0_i32 = arith.constant 0 : i32
    %c0_i32_0 = arith.constant 0 : i32
    %c0_i32_1 = arith.constant 0 : i32
    return %c0_i32, %c0_i32_0 : i32, i32
  }
  func.func @transform_2(%arg0: i32, %arg1: i32) -> (i32, i32) {
    %c0_i32 = arith.constant 0 : i32
    %c0_i32_0 = arith.constant 0 : i32
    %c0_i32_1 = arith.constant 0 : i32
    return %c0_i32, %c0_i32_0 : i32, i32
  }
  func.func @transform_3(%arg0: i32, %arg1: i32) -> (i32, i32, i32) {
    %c0_i32 = arith.constant 0 : i32
    %c0_i32_0 = arith.constant 0 : i32
    return %arg0, %arg1, %c0_i32 : i32, i32, i32
  }
}

</mosaic_0001>

<llo_original>
// kernel: tpu_custom_call.1
$region0: #{tpu_custom_call.1}
  #allocation0 [shape = 'u32[]', space=smem, size = 0x4, offset = 0x4, fixed_abs, tag = 'smem constant byte address 0x4 - core index']
  #allocation1 [shape = 'u32[72,128]{1,0:T(1,128)}', space=vmem, size = 0x9000, scoped, tag = 'internal scratch']
  %s0 = inlined_call_operand.hbm [shape: f32[2,256,128], index: 0, kind: input, shape index: {}]
  %s1 = inlined_call_operand.hbm [shape: f32[128,128], index: 1, kind: input, shape index: {}]
  %s2 = inlined_call_operand.vmem [shape: f32[1,128], index: 2, kind: input, shape index: {}]
  %s3 = inlined_call_operand.hbm [shape: f32[2,256,128], index: 3, kind: output, shape index: {}]
  %s4 = sld [smem:[#allocation0]]
  $region53: #{tpu_custom_call.1} parent=0
    _
  %s6 = ssub.s32 1, %s4
  %s7 = scalar_select 0, %s6, %s4
  $region1: #{tpu_custom_call.1} parent=0
    #allocation2 [shape = 'u8[262144]{0}', space=vmem, size = 0x40000, scoped, tag = 'input window, operand 0']
    #allocation3 [shape = 's32[2]{0}', space=sflag, size = 0x8, scoped, tag = 'scoped memory for tpu_custom_call.1']
    #allocation4 [shape = 's32[2]{0}', space=sflag, size = 0x8, scoped, tag = 'scoped memory for tpu_custom_call.1']
    #allocation5 [shape = 'u8[65536]{0}', space=vmem, size = 0x10000, scoped, tag = 'input window, operand 1, single buffered']
    #allocation6 [shape = 's32[1]{0}', space=sflag, size = 0x4, scoped, tag = 'scoped memory for tpu_custom_call.1']
    #allocation7 [shape = 'u8[262144]{0}', space=vmem, size = 0x40000, scoped, tag = 'output window, operand 0']
    %8 = vsyncpa [#allocation3], 0
    %s9 = scalar_lea.sflag [#allocation3], 1
    %10 = vsyncpa %s9, 0
    %11 = vsyncpa [#allocation6], 0
    %12 = vsyncpa [#allocation4], 0
    %s13 = scalar_lea.sflag [#allocation4], 1
    %14 = vsyncpa %s13, 0
    loop: start=0, step=1, limit=4
    $region2: #{tpu_custom_call.1} parent=1 // loop_pre_header
      _
    $region3: #{tpu_custom_call.1} parent=1 // loop_header
      %s16 = sphi 0, %s20
      %p17 = scmp.ge.s32.totalorder %s16, 4
      %s23 = sphi 0, %s35
      %s24 = sphi 0, %s31
      %s25 = sphi 0, %s23
      %s26 = sphi 0, %s24
      %s27 = sphi 0, %s25
      %s28 = sphi 0, %s26
      %s40 = sphi 0, %s42
      %s43 = sphi 0, %s40
      %s44 = sphi 0, %s43
      %s60 = sphi 0, %s44
      %s64 = sphi 0, %s64
      %s66 = sphi 0, %s64
      %s67 = sphi 0, %s66
      %s81 = sphi 0, %s67
      %s85 = sphi 0, %s85
      %s87 = sphi 0, %s85
      %s88 = sphi 0, %s87
      %s102 = sphi 0, %s88
      %s110 = sphi 0, %s112
      %s113 = sphi 0, %s110
      %s114 = sphi 0, %s113
      %s130 = sphi 0, %s114
    $region4: #{tpu_custom_call.1} parent=1 // loop_header_branch
      %19 = sbr.rel (%p17) target = $region8
    $region5: #{tpu_custom_call.1} parent=1 // loop_body
      %s21 = ssub.s32 %s16, 1
      %s22 = ssub.s32 %s16, 2
      %s29 = sadd.s32 1, %s24
      %p30 = scmp.ge.s32.totalorder %s29, 1
      %s31 = scalar_select %p30, 0, %s29
      %s32 = sadd.s32 1, %s23
      %s33 = scalar_select %p30, %s32, %s23
      %p34 = scmp.ge.s32.totalorder %s33, 2
      %s35 = scalar_select %p34, 0, %s33
      %s36 = ssub.s32 %s23, %s35
      %s37 = ssub.s32 %s24, %s31
      %s38 = sor.u32 %s36, %s37
      %p39 = scmp.eq.s32.totalorder %s38, 0
      %s41 = sadd.s32 %s40, 1
      %s42 = scalar_select %p39, %s40, %s41
      %p45 = pneg %p39
      %p46 = scmp.eq.s32.totalorder %s16, 1
      %p47 = por %p45, %p46
      %p48 = scmp.ne.s32.totalorder %s40, %s43
      %p49 = scmp.eq.s32.totalorder %s16, 0
      %p50 = por %p48, %p49
      %p51 = scmp.ne.s32.totalorder %s40, %s43
      %p52 = scmp.eq.s32.totalorder %s21, 1
      %p53 = por %p51, %p52
      %p54 = scmp.ne.s32.totalorder %s43, %s44
      %p55 = scmp.eq.s32.totalorder %s21, 0
      %p56 = por %p54, %p55
      %p57 = scmp.ne.s32.totalorder %s43, %s44
      %p58 = scmp.eq.s32.totalorder %s22, 1
      %p59 = por %p57, %p58
      %p61 = scmp.ne.s32.totalorder %s44, %s60
      %p62 = scmp.eq.s32.totalorder %s22, 0
      %p63 = por %p61, %p62
      %s65 = sadd.s32 %s64, 1
      %p68 = scmp.eq.s32.totalorder %s16, 1
      %p69 = scmp.ne.s32.totalorder %s64, %s66
      %p70 = scmp.eq.s32.totalorder %s16, 0
      %p71 = por %p69, %p70
      %p72 = scmp.ne.s32.totalorder %s64, %s66
      %p73 = scmp.eq.s32.totalorder %s21, 1
      %p74 = por %p72, %p73
      %p75 = scmp.ne.s32.totalorder %s66, %s67
      %p76 = scmp.eq.s32.totalorder %s21, 0
      %p77 = por %p75, %p76
      %p78 = scmp.ne.s32.totalorder %s66, %s67
      %p79 = scmp.eq.s32.totalorder %s22, 1
      %p80 = por %p78, %p79
      %p82 = scmp.ne.s32.totalorder %s67, %s81
      %p83 = scmp.eq.s32.totalorder %s22, 0
      %p84 = por %p82, %p83
      %s86 = sadd.s32 %s85, 1
      %p89 = scmp.eq.s32.totalorder %s16, 1
      %p90 = scmp.ne.s32.totalorder %s85, %s87
      %p91 = scmp.eq.s32.totalorder %s16, 0
      %p92 = por %p90, %p91
      %p93 = scmp.ne.s32.totalorder %s85, %s87
      %p94 = scmp.eq.s32.totalorder %s21, 1
      %p95 = por %p93, %p94
      %p96 = scmp.ne.s32.totalorder %s87, %s88
      %p97 = scmp.eq.s32.totalorder %s21, 0
      %p98 = por %p96, %p97
      %p99 = scmp.ne.s32.totalorder %s87, %s88
      %p100 = scmp.eq.s32.totalorder %s22, 1
      %p101 = por %p99, %p100
      %p103 = scmp.ne.s32.totalorder %s88, %s102
      %p104 = scmp.eq.s32.totalorder %s22, 0
      %p105 = por %p103, %p104
      %s106 = ssub.s32 %s23, %s35
      %s107 = ssub.s32 %s24, %s31
      %s108 = sor.u32 %s106, %s107
      %p109 = scmp.eq.s32.totalorder %s108, 0
      %s111 = sadd.s32 %s110, 1
      %s112 = scalar_select %p109, %s110, %s111
      %p115 = pneg %p109
      %p116 = scmp.eq.s32.totalorder %s16, 1
      %p117 = por %p115, %p116
      %p118 = scmp.ne.s32.totalorder %s110, %s113
      %p119 = scmp.eq.s32.totalorder %s16, 0
      %p120 = por %p118, %p119
      %p121 = scmp.ne.s32.totalorder %s110, %s113
      %p122 = scmp.eq.s32.totalorder %s21, 1
      %p123 = por %p121, %p122
      %p124 = scmp.ne.s32.totalorder %s113, %s114
      %p125 = scmp.eq.s32.totalorder %s21, 0
      %p126 = por %p124, %p125
      %p127 = scmp.ne.s32.totalorder %s113, %s114
      %p128 = scmp.eq.s32.totalorder %s22, 1
      %p129 = por %p127, %p128
      %p131 = scmp.ne.s32.totalorder %s114, %s130
      %p132 = scmp.eq.s32.totalorder %s22, 0
      %p133 = por %p131, %p132
      %p134 = scmp.le.s32.totalorder 1, %s16
      %p135 = scmp.lt.s32.totalorder %s16, 3
      %p136 = pnand %p134, %p135
      %p137 = pneg %p136
      // Predicated region
      $region9: #{tpu_custom_call.1} parent=5 // pred_check
        _
      $region10: #{tpu_custom_call.1} parent=5 // pred_check_branch
        %139 = sbr.rel (%p136) target = $region12
      $region11: #{tpu_custom_call.1} parent=5 // pred_region
        %s140 = ssub.s32 %s16, 1
        // Predicated region
        $region13: #{tpu_custom_call.1} parent=11 // pred_check
          %p141 = pneg %p77
        $region14: #{tpu_custom_call.1} parent=11 // pred_check_branch
          %143 = sbr.rel (%p141) target = $region16
        $region15: #{tpu_custom_call.1} parent=11 // pred_region
          %145 = vsyncadd [#allocation6], 0
          %s146 = sshll.u32 %s1, 4
          %s147 = int_to_ptr.hbm [resolvable:$true] %s146
          %s148 = sshll.u32 [#allocation5], 4
          %s149 = int_to_ptr.vmem [resolvable:$true] %s148
          %154 = dma.hbm_to_vmem [thread:$0]  %s147, 2048, %s149, [#allocation6], 128, 128, 8
        $region16: #{tpu_custom_call.1} parent=11 // pred_fallthru
          _
        // Predicated region
        $region17: #{tpu_custom_call.1} parent=11 // pred_check
          %p155 = pneg %p98
        $region18: #{tpu_custom_call.1} parent=11 // pred_check_branch
          %157 = sbr.rel (%p155) target = $region20
        $region19: #{tpu_custom_call.1} parent=11 // pred_region
          _
        $region20: #{tpu_custom_call.1} parent=11 // pred_fallthru
          _
      $region12: #{tpu_custom_call.1} parent=5 // pred_fallthru
        _
      %p158 = scmp.lt.s32.totalorder %s16, 2
      // Predicated region
      $region21: #{tpu_custom_call.1} parent=5 // pred_check
        %p159 = pneg %p158
      $region22: #{tpu_custom_call.1} parent=5 // pred_check_branch
        %161 = sbr.rel (%p159) target = $region24
      $region23: #{tpu_custom_call.1} parent=5 // pred_region
        // Predicated region
        $region25: #{tpu_custom_call.1} parent=23 // pred_check
          %p162 = pneg %p50
        $region26: #{tpu_custom_call.1} parent=23 // pred_check_branch
          %164 = sbr.rel (%p162) target = $region28
        $region27: #{tpu_custom_call.1} parent=23 // pred_region
          %s165 = sand.u32 %s40, 1
          %s166 = scalar_lea.sflag [#allocation3], %s165
          %s167 = sand.u32 %s40, 1
          %s168 = smul.addr %s167, 256
          %s169 = scalar_lea.vmem [#allocation2], %s168
          %s170 = smul.u32 32, %s24
          %172 = vsyncadd %s166, 0
          %s173 = smul.addr %s23, 32
          %s174 = sadd.s32 %s170, %s173
          %s175 = smul.addr %s174, 8
          %s176 = scalar_lea.hbm %s0, %s175
          %s177 = sshll.u32 %s176, 4
          %s178 = int_to_ptr.hbm [resolvable:$true] %s177
          %s179 = sshll.u32 %s169, 4
          %s180 = int_to_ptr.vmem [resolvable:$true] %s179
          %185 = dma.hbm_to_vmem [thread:$0]  %s178, 4096, %s180, %s166, 128, 128, 8
        $region28: #{tpu_custom_call.1} parent=23 // pred_fallthru
          _
      $region24: #{tpu_custom_call.1} parent=5 // pred_fallthru
        _
      %p186 = scmp.le.s32.totalorder 1, %s16
      %p187 = scmp.lt.s32.totalorder %s16, 3
      %p188 = pnand %p186, %p187
      %p189 = pneg %p188
      // Predicated region
      $region29: #{tpu_custom_call.1} parent=5 // pred_check
        _
      $region30: #{tpu_custom_call.1} parent=5 // pred_check_branch
        %191 = sbr.rel (%p188) target = $region32
      $region31: #{tpu_custom_call.1} parent=5 // pred_region
        %s192 = ssub.s32 %s16, 1
        %s193 = sand.u32 %s43, 1
        %s194 = scalar_lea.sflag [#allocation3], %s193
        %s195 = sand.u32 %s43, 1
        %s196 = smul.addr %s195, 256
        %s197 = scalar_lea.vmem [#allocation2], %s196
        // Predicated region
        $region33: #{tpu_custom_call.1} parent=31 // pred_check
          %p198 = pneg %p56
        $region34: #{tpu_custom_call.1} parent=31 // pred_check_branch
          %200 = sbr.rel (%p198) target = $region36
        $region35: #{tpu_custom_call.1} parent=31 // pred_region
          %202 = dma.done %s194, 4096
        $region36: #{tpu_custom_call.1} parent=31 // pred_fallthru
          _
        // Predicated region
        $region37: #{tpu_custom_call.1} parent=31 // pred_check
          %p203 = pneg %p77
        $region38: #{tpu_custom_call.1} parent=31 // pred_check_branch
          %205 = sbr.rel (%p203) target = $region40
        $region39: #{tpu_custom_call.1} parent=31 // pred_region
          %207 = dma.done [#allocation6], 2048
        $region40: #{tpu_custom_call.1} parent=31 // pred_fallthru
          _
        %s208 = sand.u32 %s43, 1
        %s209 = scalar_lea.sflag [#allocation3], %s208
        %s210 = sand.u32 %s43, 1
        %s211 = smul.addr %s210, 256
        %s212 = scalar_lea.vmem [#allocation2], %s211
        %p213 = pneg %p56
        %p214 = pneg %p53
        %p215 = pneg %p77
        %p216 = pneg %p74
        %p217 = pneg %p98
        %p218 = pneg %p95
        %p219 = pneg %p126
        %p220 = pneg %p123
        %s221 = sand.u32 %s113, 1
        %s222 = scalar_lea.sflag [#allocation4], %s221
        %s223 = sand.u32 %s113, 1
        %s224 = smul.addr %s223, 256
        %s225 = scalar_lea.vmem [#allocation7], %s224
        %s226 = smul.u32 32, %s26
        %s227 = smul.u32 32, %s26
        %v228 = vld [vmem:[%s197] sm:$0xff]
        %v229 = vld [vmem:[%s197 + $0x8] sm:$0xff]
        %v230 = vld [vmem:[%s197 + $0x10] sm:$0xff]
        %v231 = vld [vmem:[%s197 + $0x18] sm:$0xff]
        %v232 = vld [vmem:[%s197 + $0x20] sm:$0xff]
        %v233 = vld [vmem:[%s197 + $0x28] sm:$0xff]
        %v234 = vld [vmem:[%s197 + $0x30] sm:$0xff]
        %v235 = vld [vmem:[%s197 + $0x38] sm:$0xff]
        %v236 = vld [vmem:[%s197 + $0x40] sm:$0xff]
        %v237 = vld [vmem:[%s197 + $0x48] sm:$0xff]
        %v238 = vld [vmem:[%s197 + $0x50] sm:$0xff]
        %v239 = vld [vmem:[%s197 + $0x58] sm:$0xff]
        %v240 = vld [vmem:[%s197 + $0x60] sm:$0xff]
        %v241 = vld [vmem:[%s197 + $0x68] sm:$0xff]
        %v242 = vld [vmem:[%s197 + $0x70] sm:$0xff]
        %v243 = vld [vmem:[%s197 + $0x78] sm:$0xff]
        %v244 = vld [vmem:[%s197 + $0x80] sm:$0xff]
        %v245 = vld [vmem:[%s197 + $0x88] sm:$0xff]
        %v246 = vld [vmem:[%s197 + $0x90] sm:$0xff]
        %v247 = vld [vmem:[%s197 + $0x98] sm:$0xff]
        %v248 = vld [vmem:[%s197 + $0xa0] sm:$0xff]
        %v249 = vld [vmem:[%s197 + $0xa8] sm:$0xff]
        %v250 = vld [vmem:[%s197 + $0xb0] sm:$0xff]
        %v251 = vld [vmem:[%s197 + $0xb8] sm:$0xff]
        %v252 = vld [vmem:[%s197 + $0xc0] sm:$0xff]
        %v253 = vld [vmem:[%s197 + $0xc8] sm:$0xff]
        %v254 = vld [vmem:[%s197 + $0xd0] sm:$0xff]
        %v255 = vld [vmem:[%s197 + $0xd8] sm:$0xff]
        %v256 = vld [vmem:[%s197 + $0xe0] sm:$0xff]
        %v257 = vld [vmem:[%s197 + $0xe8] sm:$0xff]
        %v258 = vld [vmem:[%s197 + $0xf0] sm:$0xff]
        %v259 = vld [vmem:[%s197 + $0xf8] sm:$0xff]
        %v260 = vld [vmem:[#allocation5] sm:$0xff]
        %v261 = vld [vmem:[#allocation5 + $0x8] sm:$0xff]
        %v262 = vld [vmem:[#allocation5 + $0x10] sm:$0xff]
        %v263 = vld [vmem:[#allocation5 + $0x18] sm:$0xff]
        %v264 = vld [vmem:[#allocation5 + $0x20] sm:$0xff]
        %v265 = vld [vmem:[#allocation5 + $0x28] sm:$0xff]
        %v266 = vld [vmem:[#allocation5 + $0x30] sm:$0xff]
        %v267 = vld [vmem:[#allocation5 + $0x38] sm:$0xff]
        %v268 = vld [vmem:[#allocation5 + $0x40] sm:$0xff]
        %v269 = vld [vmem:[#allocation5 + $0x48] sm:$0xff]
        %v270 = vld [vmem:[#allocation5 + $0x50] sm:$0xff]
        %v271 = vld [vmem:[#allocation5 + $0x58] sm:$0xff]
        %v272 = vld [vmem:[#allocation5 + $0x60] sm:$0xff]
        %v273 = vld [vmem:[#allocation5 + $0x68] sm:$0xff]
        %v274 = vld [vmem:[#allocation5 + $0x70] sm:$0xff]
        %v275 = vld [vmem:[#allocation5 + $0x78] sm:$0xff]
        %v276 = vld [vmem:[%s2] sm:$0x1]
        %v278 = vperm.slane %v276, 0
        %280 = vmatpush.msra.mxu0 %v275
        %281 = vmatpush.msra.mxu0 %v274
        %282 = vmatpush.msra.mxu0 %v273
        %283 = vmatpush.msra.mxu0 %v272
        %284 = vmatpush.msra.mxu0 %v271
        %285 = vmatpush.msra.mxu0 %v270
        %286 = vmatpush.msra.mxu0 %v269
        %287 = vmatpush.msra.mxu0 %v268
        %288 = vmatpush.msra.mxu0 %v267
        %289 = vmatpush.msra.mxu0 %v266
        %290 = vmatpush.msra.mxu0 %v265
        %291 = vmatpush.msra.mxu0 %v264
        %292 = vmatpush.msra.mxu0 %v263
        %293 = vmatpush.msra.mxu0 %v262
        %294 = vmatpush.msra.mxu0 %v261
        %295 = vmatpush.msra.mxu0 %v260
        %296 = vmatmul.f32.gmra.mxu0 %v228
        %v297 = vpop.f32.mrf.mxu0
        %v298 = vadd.f32 %v278, %v297
        %299 = vmatmul.f32.gmra.mxu0 %v229
        %v300 = vpop.f32.mrf.mxu0
        %v301 = vadd.f32 %v278, %v300
        %302 = vmatmul.f32.gmra.mxu0 %v230
        %v303 = vpop.f32.mrf.mxu0
        %v304 = vadd.f32 %v278, %v303
        %305 = vmatmul.f32.gmra.mxu0 %v231
        %v306 = vpop.f32.mrf.mxu0
        %v307 = vadd.f32 %v278, %v306
        %308 = vmatmul.f32.gmra.mxu0 %v232
        %v309 = vpop.f32.mrf.mxu0
        %v310 = vadd.f32 %v278, %v309
        %311 = vmatmul.f32.gmra.mxu0 %v233
        %v312 = vpop.f32.mrf.mxu0
        %v313 = vadd.f32 %v278, %v312
        %314 = vmatmul.f32.gmra.mxu0 %v234
        %v315 = vpop.f32.mrf.mxu0
        %v316 = vadd.f32 %v278, %v315
        %317 = vmatmul.f32.gmra.mxu0 %v235
        %v318 = vpop.f32.mrf.mxu0
        %v319 = vadd.f32 %v278, %v318
        %320 = vmatmul.f32.gmra.mxu0 %v236
        %v321 = vpop.f32.mrf.mxu0
        %v322 = vadd.f32 %v278, %v321
        %323 = vmatmul.f32.gmra.mxu0 %v237
        %v324 = vpop.f32.mrf.mxu0
        %v325 = vadd.f32 %v278, %v324
        %326 = vmatmul.f32.gmra.mxu0 %v238
        %v327 = vpop.f32.mrf.mxu0
        %v328 = vadd.f32 %v278, %v327
        %329 = vmatmul.f32.gmra.mxu0 %v239
        %v330 = vpop.f32.mrf.mxu0
        %v331 = vadd.f32 %v278, %v330
        %332 = vmatmul.f32.gmra.mxu0 %v240
        %v333 = vpop.f32.mrf.mxu0
        %v334 = vadd.f32 %v278, %v333
        %335 = vmatmul.f32.gmra.mxu0 %v241
        %v336 = vpop.f32.mrf.mxu0
        %v337 = vadd.f32 %v278, %v336
        %338 = vmatmul.f32.gmra.mxu0 %v242
        %v339 = vpop.f32.mrf.mxu0
        %v340 = vadd.f32 %v278, %v339
        %341 = vmatmul.f32.gmra.mxu0 %v243
        %v342 = vpop.f32.mrf.mxu0
        %v343 = vadd.f32 %v278, %v342
        %344 = vmatmul.f32.gmra.mxu0 %v244
        %v345 = vpop.f32.mrf.mxu0
        %v346 = vadd.f32 %v278, %v345
        %347 = vmatmul.f32.gmra.mxu0 %v245
        %v348 = vpop.f32.mrf.mxu0
        %v349 = vadd.f32 %v278, %v348
        %350 = vmatmul.f32.gmra.mxu0 %v246
        %v351 = vpop.f32.mrf.mxu0
        %v352 = vadd.f32 %v278, %v351
        %353 = vmatmul.f32.gmra.mxu0 %v247
        %v354 = vpop.f32.mrf.mxu0
        %v355 = vadd.f32 %v278, %v354
        %356 = vmatmul.f32.gmra.mxu0 %v248
        %v357 = vpop.f32.mrf.mxu0
        %v358 = vadd.f32 %v278, %v357
        %359 = vmatmul.f32.gmra.mxu0 %v249
        %v360 = vpop.f32.mrf.mxu0
        %v361 = vadd.f32 %v278, %v360
        %362 = vmatmul.f32.gmra.mxu0 %v250
        %v363 = vpop.f32.mrf.mxu0
        %v364 = vadd.f32 %v278, %v363
        %365 = vmatmul.f32.gmra.mxu0 %v251
        %v366 = vpop.f32.mrf.mxu0
        %v367 = vadd.f32 %v278, %v366
        %368 = vmatmul.f32.gmra.mxu0 %v252
        %v369 = vpop.f32.mrf.mxu0
        %v370 = vadd.f32 %v278, %v369
        %371 = vmatmul.f32.gmra.mxu0 %v253
        %v372 = vpop.f32.mrf.mxu0
        %v373 = vadd.f32 %v278, %v372
        %374 = vmatmul.f32.gmra.mxu0 %v254
        %v375 = vpop.f32.mrf.mxu0
        %v376 = vadd.f32 %v278, %v375
        %377 = vmatmul.f32.gmra.mxu0 %v255
        %v378 = vpop.f32.mrf.mxu0
        %v379 = vadd.f32 %v278, %v378
        %380 = vmatmul.f32.gmra.mxu0 %v256
        %v381 = vpop.f32.mrf.mxu0
        %v382 = vadd.f32 %v278, %v381
        %383 = vmatmul.f32.gmra.mxu0 %v257
        %v384 = vpop.f32.mrf.mxu0
        %v385 = vadd.f32 %v278, %v384
        %386 = vmatmul.f32.gmra.mxu0 %v258
        %v387 = vpop.f32.mrf.mxu0
        %v388 = vadd.f32 %v278, %v387
        %389 = vmatmul.f32.gmra.mxu0 %v259
        %v390 = vpop.f32.mrf.mxu0
        %v391 = vadd.f32 %v278, %v390
        %392 = vdwg.mxu0
        %393 = vst [vmem:[%s225] sm:$0xff] %v298
        %394 = vst [vmem:[%s225 + $0x8] sm:$0xff] %v301
        %395 = vst [vmem:[%s225 + $0x10] sm:$0xff] %v304
        %396 = vst [vmem:[%s225 + $0x18] sm:$0xff] %v307
        %397 = vst [vmem:[%s225 + $0x20] sm:$0xff] %v310
        %398 = vst [vmem:[%s225 + $0x28] sm:$0xff] %v313
        %399 = vst [vmem:[%s225 + $0x30] sm:$0xff] %v316
        %400 = vst [vmem:[%s225 + $0x38] sm:$0xff] %v319
        %401 = vst [vmem:[%s225 + $0x40] sm:$0xff] %v322
        %402 = vst [vmem:[%s225 + $0x48] sm:$0xff] %v325
        %403 = vst [vmem:[%s225 + $0x50] sm:$0xff] %v328
        %404 = vst [vmem:[%s225 + $0x58] sm:$0xff] %v331
        %405 = vst [vmem:[%s225 + $0x60] sm:$0xff] %v334
        %406 = vst [vmem:[%s225 + $0x68] sm:$0xff] %v337
        %407 = vst [vmem:[%s225 + $0x70] sm:$0xff] %v340
        %408 = vst [vmem:[%s225 + $0x78] sm:$0xff] %v343
        %409 = vst [vmem:[%s225 + $0x80] sm:$0xff] %v346
        %410 = vst [vmem:[%s225 + $0x88] sm:$0xff] %v349
        %411 = vst [vmem:[%s225 + $0x90] sm:$0xff] %v352
        %412 = vst [vmem:[%s225 + $0x98] sm:$0xff] %v355
        %413 = vst [vmem:[%s225 + $0xa0] sm:$0xff] %v358
        %414 = vst [vmem:[%s225 + $0xa8] sm:$0xff] %v361
        %415 = vst [vmem:[%s225 + $0xb0] sm:$0xff] %v364
        %416 = vst [vmem:[%s225 + $0xb8] sm:$0xff] %v367
        %417 = vst [vmem:[%s225 + $0xc0] sm:$0xff] %v370
        %418 = vst [vmem:[%s225 + $0xc8] sm:$0xff] %v373
        %419 = vst [vmem:[%s225 + $0xd0] sm:$0xff] %v376
        %420 = vst [vmem:[%s225 + $0xd8] sm:$0xff] %v379
        %421 = vst [vmem:[%s225 + $0xe0] sm:$0xff] %v382
        %422 = vst [vmem:[%s225 + $0xe8] sm:$0xff] %v385
        %423 = vst [vmem:[%s225 + $0xf0] sm:$0xff] %v388
        %424 = vst [vmem:[%s225 + $0xf8] sm:$0xff] %v391
        %s425 = sand.u32 %s113, 1
        %s426 = scalar_lea.sflag [#allocation4], %s425
        %s427 = sand.u32 %s113, 1
        %s428 = smul.addr %s427, 256
        %s429 = scalar_lea.vmem [#allocation7], %s428
        // Predicated region
        $region41: #{tpu_custom_call.1} parent=31 // pred_check
          %p430 = pneg %p123
        $region42: #{tpu_custom_call.1} parent=31 // pred_check_branch
          %432 = sbr.rel (%p430) target = $region44
        $region43: #{tpu_custom_call.1} parent=31 // pred_region
          %s433 = smul.u32 32, %s26
          %435 = vsyncadd %s426, 0
          %s436 = smul.addr %s25, 32
          %s437 = sadd.s32 %s433, %s436
          %s438 = smul.addr %s437, 8
          %s439 = scalar_lea.hbm %s3, %s438
          %s440 = sshll.u32 %s429, 4
          %s441 = int_to_ptr.vmem [resolvable:$true] %s440
          %s442 = sshll.u32 %s439, 4
          %s443 = int_to_ptr.hbm [resolvable:$true] %s442
          %448 = dma.vmem_to_hbm [thread:$0]  %s441, 4096, %s443, %s426, 128, 128, 8
        $region44: #{tpu_custom_call.1} parent=31 // pred_fallthru
          _
      $region32: #{tpu_custom_call.1} parent=5 // pred_fallthru
        _
      %p449 = scmp.le.s32.totalorder 2, %s16
      // Predicated region
      $region45: #{tpu_custom_call.1} parent=5 // pred_check
        %p450 = pneg %p449
      $region46: #{tpu_custom_call.1} parent=5 // pred_check_branch
        %452 = sbr.rel (%p450) target = $region48
      $region47: #{tpu_custom_call.1} parent=5 // pred_region
        %s453 = ssub.s32 %s16, 2
        // Predicated region
        $region49: #{tpu_custom_call.1} parent=47 // pred_check
          %p454 = pneg %p129
        $region50: #{tpu_custom_call.1} parent=47 // pred_check_branch
          %456 = sbr.rel (%p454) target = $region52
        $region51: #{tpu_custom_call.1} parent=47 // pred_region
          %s457 = sand.u32 %s114, 1
          %s458 = scalar_lea.sflag [#allocation4], %s457
          %s459 = sand.u32 %s114, 1
          %s460 = smul.addr %s459, 256
          %s461 = scalar_lea.vmem [#allocation7], %s460
          %463 = dma.done %s458, 4096
        $region52: #{tpu_custom_call.1} parent=47 // pred_fallthru
          _
      $region48: #{tpu_custom_call.1} parent=5 // pred_fallthru
        _
    $region6: #{tpu_custom_call.1} parent=1 // loop_footer
      %s20 = sadd.s32 1, %s16
    $region7: #{tpu_custom_call.1} parent=1 // loop_footer_branch
      %15 = sbr.rel target = $region3
    $region8: #{tpu_custom_call.1} parent=1 // loop_exit
      _
    %464 = vsyncpa [#allocation3], 1
    %s465 = scalar_lea.sflag [#allocation3], 1
    %466 = vsyncpa %s465, 1
    %467 = vsyncpa [#allocation6], 1
    %468 = vsyncpa [#allocation4], 1
    %s469 = scalar_lea.sflag [#allocation4], 1
    %470 = vsyncpa %s469, 1

</llo_original>
